<compile_context>
chip_gen: v7x
topology: tpu7x:2x2x1
jax: 0.10.0
libtpu: 0.0.40
codegen_flags: <defaults>
</compile_context>

<pallas_src>
import jax
import jax.numpy as jnp
from jax import lax
from jax.experimental import pallas as pl
from jax.experimental.pallas import tpu as pltpu

INV_COEFF = 25.0
VAR_COEFF = 25.0
COV_COEFF = 1.0

# Contract axis 0 of both operands: dot_general(a, b) == a.T @ b without an explicit
# (XLU) transpose; the MXU feed path handles the transposed LHS.
_GRAM_DIMS = (((0,), (0,)), ((), ()))

_DEFAULT_VMEM_BYTES = 64 * 1024 * 1024  # v7x physical VMEM; conservative elsewhere.


def _vmem_budget_bytes():
    """Generation-aware VMEM capacity (falls back to the v7x 64 MiB ceiling)."""
    try:
        info = pltpu.get_tpu_info()
        return int(getattr(info, "vmem_capacity_bytes", _DEFAULT_VMEM_BYTES))
    except Exception:
        return _DEFAULT_VMEM_BYTES


def _pick_block(size, candidates):
    for c in candidates:
        if size % c == 0:
            return c
    return size  # fall back to a single block along this dim


# ----------------------------------------------------------------------------------
# Single-block kernel: whole (N, D) problem in one VMEM block (grid-less call).
# ----------------------------------------------------------------------------------
def _vicreg_loss_single(x, y, mxu_dtype):
    n, d = x.shape
    mxu_dtype = jnp.dtype(mxu_dtype)
    use_f32_mxu = mxu_dtype == jnp.dtype(jnp.float32)

    def kernel(x_ref, y_ref, out_ref):
        xf = x_ref[...].astype(jnp.float32)
        yf = y_ref[...].astype(jnp.float32)
        inv_nm1 = 1.0 / (n - 1)

        # ---- invariance (MSE) ----
        diff = xf - yf
        sim_loss = jnp.sum(diff * diff) * (1.0 / (n * d))

        # ---- center once; per-column sum-of-squares feeds the variance term ----
        xc = xf - jnp.mean(xf, axis=0, keepdims=True)
        yc = yf - jnp.mean(yf, axis=0, keepdims=True)
        ss_x = jnp.sum(xc * xc, axis=0, keepdims=True)  # == var * (n-1), f32 VPU
        ss_y = jnp.sum(yc * yc, axis=0, keepdims=True)
        std_x = jnp.sqrt(ss_x * inv_nm1 + 0.0001)
        std_y = jnp.sqrt(ss_y * inv_nm1 + 0.0001)
        std_loss = (jnp.mean(jnp.maximum(1.0 - std_x, 0.0))
                    + jnp.mean(jnp.maximum(1.0 - std_y, 0.0)))

        # ---- covariance: bf16 MXU feed, f32 accumulation; diagonal removed by
        # subtracting sum(diag^2) where diag is recomputed from the *same* values
        # the MXU sees, so there is no mixed-precision residual. ----
        if use_f32_mxu:
            xcm, ycm = xc, yc
            ssc_x, ssc_y = ss_x, ss_y
        else:
            xcm = xc.astype(mxu_dtype)
            ycm = yc.astype(mxu_dtype)
            xcf = xcm.astype(jnp.float32)
            ycf = ycm.astype(jnp.float32)
            ssc_x = jnp.sum(xcf * xcf, axis=0, keepdims=True)
            ssc_y = jnp.sum(ycf * ycf, axis=0, keepdims=True)
        g_x = lax.dot_general(xcm, xcm, _GRAM_DIMS, preferred_element_type=jnp.float32)
        g_y = lax.dot_general(ycm, ycm, _GRAM_DIMS, preferred_element_type=jnp.float32)
        cov_scale = inv_nm1 * inv_nm1 / d
        cov_loss = ((jnp.sum(g_x * g_x) - jnp.sum(ssc_x * ssc_x))
                    + (jnp.sum(g_y * g_y) - jnp.sum(ssc_y * ssc_y))) * cov_scale

        out_ref[0, 0] = (INV_COEFF * sim_loss + VAR_COEFF * std_loss
                         + COV_COEFF * cov_loss)

    out = pl.pallas_call(
        kernel,
        out_shape=jax.ShapeDtypeStruct((1, 1), jnp.float32),
        in_specs=[
            pl.BlockSpec((n, d), lambda: (0, 0)),
            pl.BlockSpec((n, d), lambda: (0, 0)),
        ],
        out_specs=pl.BlockSpec(memory_space=pltpu.SMEM),
        cost_estimate=pl.CostEstimate(
            flops=int(4 * n * d * d + 12 * n * d),
            transcendentals=int(2 * d),
            bytes_accessed=int(2 * n * d * jnp.dtype(x.dtype).itemsize + 4),
        ),
    )(x, y)
    return out[0, 0]


# ----------------------------------------------------------------------------------
# Column means (exact two-pass centering): small memory-bound Pallas stats kernel.
# ----------------------------------------------------------------------------------
def _column_means(x, y, block_n, block_d):
    n, d = x.shape
    n_k = n // block_n
    n_c = d // block_d
    inv_n = 1.0 / n

    def kernel(x_ref, y_ref, mx_ref, my_ref):
        k = pl.program_id(1)

        @pl.when(k == 0)
        def _():
            mx_ref[...] = jnp.zeros_like(mx_ref)
            my_ref[...] = jnp.zeros_like(my_ref)

        mx_ref[...] += jnp.sum(x_ref[...].astype(jnp.float32), axis=0, keepdims=True)
        my_ref[...] += jnp.sum(y_ref[...].astype(jnp.float32), axis=0, keepdims=True)

        @pl.when(k == pl.num_programs(1) - 1)
        def _():
            mx_ref[...] = mx_ref[...] * inv_n
            my_ref[...] = my_ref[...] * inv_n

    return pl.pallas_call(
        kernel,
        out_shape=(jax.ShapeDtypeStruct((1, d), jnp.float32),
                   jax.ShapeDtypeStruct((1, d), jnp.float32)),
        grid=(n_c, n_k),
        in_specs=[
            pl.BlockSpec((block_n, block_d), lambda c, k: (k, c)),
            pl.BlockSpec((block_n, block_d), lambda c, k: (k, c)),
        ],
        out_specs=(pl.BlockSpec((1, block_d), lambda c, k: (0, c)),
                   pl.BlockSpec((1, block_d), lambda c, k: (0, c))),
        compiler_params=pltpu.CompilerParams(
            dimension_semantics=("parallel", "arbitrary")),
    )(x, y)


# ----------------------------------------------------------------------------------
# Blocked streaming kernel: grid = (upper-tri column-block pairs, row tiles).
# Per pair: accumulate the (block_d, block_d) centered Gram of x and y on the MXU,
# reduce it to a scalar (off-diag sum of squares), and emit one fully-scaled partial
# loss contribution.  Diagonal pairs also contribute the variance and MSE terms.
# ----------------------------------------------------------------------------------
def _vicreg_loss_tiled(x, y, block_n, block_d, mxu_dtype):
    n, d = x.shape
    mxu_dtype = jnp.dtype(mxu_dtype)
    use_f32_mxu = mxu_dtype == jnp.dtype(jnp.float32)
    assert n % block_n == 0, "row tile must divide the batch"
    assert d % block_d == 0, "column tile must divide the feature dim"
    assert block_n % 8 == 0 or block_n == n
    assert block_d % 128 == 0 or block_d == d

    n_k = n // block_n
    n_d = d // block_d
    pairs = [(i, j) for i in range(n_d) for j in range(i, n_d)]
    n_pairs = len(pairs)
    di_idx = jnp.asarray([p[0] for p in pairs], dtype=jnp.int32)
    dj_idx = jnp.asarray([p[1] for p in pairs], dtype=jnp.int32)

    # Exact two-pass centering: column means from a small Pallas stats pass.
    mean_x, mean_y = _column_means(x, y, block_n, block_d)

    inv_nm1 = 1.0 / (n - 1)
    cov_scale = COV_COEFF * inv_nm1 * inv_nm1 / d
    var_scale = VAR_COEFF / d
    sim_scale = INV_COEFF / (n * d)

    def kernel(di_ref, dj_ref,
               xi_ref, xj_ref, yi_ref, yj_ref,
               mxi_ref, mxj_ref, myi_ref, myj_ref,
               out_ref,
               gx_ref, gy_ref, ssx_ref, ssy_ref, sim_ref):
        p = pl.program_id(0)
        k = pl.program_id(1)
        nk = pl.num_programs(1)
        is_diag = di_ref[p] == dj_ref[p]

        @pl.when(k == 0)
        def _():
            gx_ref[...] = jnp.zeros_like(gx_ref)
            gy_ref[...] = jnp.zeros_like(gy_ref)
            ssx_ref[...] = jnp.zeros_like(ssx_ref)
            ssy_ref[...] = jnp.zeros_like(ssy_ref)
            sim_ref[...] = jnp.zeros_like(sim_ref)

        xi = xi_ref[...].astype(jnp.float32)
        xj = xj_ref[...].astype(jnp.float32)
        yi = yi_ref[...].astype(jnp.float32)
        yj = yj_ref[...].astype(jnp.float32)

        # exact centering with precomputed column means (f32 VPU)
        xci = xi - mxi_ref[...]
        xcj = xj - mxj_ref[...]
        yci = yi - myi_ref[...]
        ycj = yj - myj_ref[...]

        # MXU feed (bf16 by default), f32 accumulation in a tile-sized scratch
        if use_f32_mxu:
            xci_m, xcj_m, yci_m, ycj_m = xci, xcj, yci, ycj
        else:
            xci_m = xci.astype(mxu_dtype)
            xcj_m = xcj.astype(mxu_dtype)
            yci_m = yci.astype(mxu_dtype)
            ycj_m = ycj.astype(mxu_dtype)
        gx_ref[...] += lax.dot_general(xci_m, xcj_m, _GRAM_DIMS,
                                       preferred_element_type=jnp.float32)
        gy_ref[...] += lax.dot_general(yci_m, ycj_m, _GRAM_DIMS,
                                       preferred_element_type=jnp.float32)

        # Per-column centered sum-of-squares (variance term) and MSE partials,
        # kept as f32 lane vectors; only diagonal pairs consume them, and the work
        # is negligible next to the Gram matmuls.
        ssx_ref[...] += jnp.sum(xci * xci, axis=0, keepdims=True)
        ssy_ref[...] += jnp.sum(yci * yci, axis=0, keepdims=True)
        dxy = xi - yi
        sim_ref[...] += jnp.sum(dxy * dxy, axis=0, keepdims=True)

        @pl.when(k == nk - 1)
        def _():
            gx = gx_ref[...]
            gy = gy_ref[...]
            full_x = jnp.sum(gx * gx)
            full_y = jnp.sum(gy * gy)

            # Tile-sized eye mask (only block_d x block_d, never D x D) removes the
            # diagonal of diagonal block pairs directly from the MXU result.
            rows = lax.broadcasted_iota(jnp.int32, (block_d, block_d), 0)
            cols = lax.broadcasted_iota(jnp.int32, (block_d, block_d), 1)
            eye = rows == cols
            diag_x = jnp.sum(jnp.where(eye, gx, 0.0) ** 2)
            diag_y = jnp.sum(jnp.where(eye, gy, 0.0) ** 2)

            cov_part = jnp.where(is_diag,
                                 (full_x - diag_x) + (full_y - diag_y),
                                 2.0 * (full_x + full_y))

            std_x = jnp.sqrt(ssx_ref[...] * inv_nm1 + 0.0001)
            std_y = jnp.sqrt(ssy_ref[...] * inv_nm1 + 0.0001)
            std_part = (jnp.sum(jnp.maximum(1.0 - std_x, 0.0))
                        + jnp.sum(jnp.maximum(1.0 - std_y, 0.0)))
            sim_part = jnp.sum(sim_ref[...])

            contrib = cov_scale * cov_part + jnp.where(
                is_diag, var_scale * std_part + sim_scale * sim_part, 0.0)
            out_ref[...] = jnp.zeros(out_ref.shape, out_ref.dtype) + contrib

    itemsize = jnp.dtype(x.dtype).itemsize
    partials = pl.pallas_call(
        kernel,
        out_shape=jax.ShapeDtypeStruct((n_pairs, 1, 128), jnp.float32),
        grid_spec=pltpu.PrefetchScalarGridSpec(
            num_scalar_prefetch=2,
            grid=(n_pairs, n_k),
            in_specs=[
                pl.BlockSpec((block_n, block_d), lambda p, k, di, dj: (k, di[p])),
                pl.BlockSpec((block_n, block_d), lambda p, k, di, dj: (k, dj[p])),
                pl.BlockSpec((block_n, block_d), lambda p, k, di, dj: (k, di[p])),
                pl.BlockSpec((block_n, block_d), lambda p, k, di, dj: (k, dj[p])),
                pl.BlockSpec((1, block_d), lambda p, k, di, dj: (0, di[p])),
                pl.BlockSpec((1, block_d), lambda p, k, di, dj: (0, dj[p])),
                pl.BlockSpec((1, block_d), lambda p, k, di, dj: (0, di[p])),
                pl.BlockSpec((1, block_d), lambda p, k, di, dj: (0, dj[p])),
            ],
            out_specs=pl.BlockSpec((1, 1, 128), lambda p, k, di, dj: (p, 0, 0)),
            scratch_shapes=[
                pltpu.VMEM((block_d, block_d), jnp.float32),  # Gram_x block acc
                pltpu.VMEM((block_d, block_d), jnp.float32),  # Gram_y block acc
                pltpu.VMEM((1, block_d), jnp.float32),        # centered sumsq x
                pltpu.VMEM((1, block_d), jnp.float32),        # centered sumsq y
                pltpu.VMEM((1, block_d), jnp.float32),        # (x - y)^2 partials
            ],
        ),
        compiler_params=pltpu.CompilerParams(
            # pair axis is parallel (v7x megacore); row-tile axis is the reduction
            dimension_semantics=("parallel", "arbitrary")),
        cost_estimate=pl.CostEstimate(
            flops=int(4 * n * block_d * block_d * n_pairs),
            transcendentals=int(2 * d),
            bytes_accessed=int(2 * (n_d + 1) * n * d * itemsize),
        ),
    )(di_idx, dj_idx, x, x, y, y, mean_x, mean_x, mean_y, mean_y)

    # Per-pair contributions are already fully scaled; the remaining sum is tiny.
    return jnp.sum(partials[:, 0, 0])


def vicreg_loss(x, y, *, block_n=None, block_d=None, mxu_dtype=jnp.bfloat16):
    """VICReg loss (inv=25, var=25, cov=1) matching the PyTorch module's forward.

    Inputs may be float32 or bfloat16 (bf16 inputs halve the HBM traffic); all math
    other than the MXU feed is performed in float32.
    """
    n, d = x.shape
    assert y.shape == (n, d)
    if block_n is None and block_d is None:
        # Generation-aware routing: the fused single-block kernel only when inputs,
        # centered copies and both (D, D) Gram tiles comfortably fit VMEM.
        footprint = 20 * n * d + 8 * d * d
        if footprint <= 0.4 * _vmem_budget_bytes():
            return _vicreg_loss_single(x, y, mxu_dtype)
    if block_n is None:
        block_n = _pick_block(n, (512, 256, 128, 64, 32, 16, 8))
    if block_d is None:
        block_d = _pick_block(d, (512, 256, 128))
    return _vicreg_loss_tiled(x, y, block_n, block_d, mxu_dtype)


def _vicreg_ref(x, y):
    """Pure-JAX reference mirroring the PyTorch module."""
    n, d = x.shape
    sim = jnp.mean((x - y) ** 2)
    std_x = jnp.sqrt(jnp.var(x, axis=0, ddof=1) + 0.0001)
    std_y = jnp.sqrt(jnp.var(y, axis=0, ddof=1) + 0.0001)
    std = jnp.mean(jax.nn.relu(1 - std_x)) + jnp.mean(jax.nn.relu(1 - std_y))
    xc = x - x.mean(axis=0)
    yc = y - y.mean(axis=0)
    cov_x = xc.T @ xc / (n - 1)
    cov_y = yc.T @ yc / (n - 1)
    mask = 1.0 - jnp.eye(d)
    cov = jnp.sum((cov_x * mask) ** 2) / d + jnp.sum((cov_y * mask) ** 2) / d
    return INV_COEFF * sim + VAR_COEFF * std + COV_COEFF * cov


if __name__ == "__main__":
    key = jax.random.PRNGKey(0)
    k1, k2, k3, k4 = jax.random.split(key, 4)

    # Small shape consistent with the module: batch of 8 32-dim embeddings.
    N, D = 8, 32
    x = jax.random.normal(k1, (N, D), dtype=jnp.float32)
    y = x + 0.1 * jax.random.normal(k2, (N, D), dtype=jnp.float32)
    ref = jax.block_until_ready(_vicreg_ref(x, y))

    # exact (f32 MXU) single-block path
    loss_f32 = jax.block_until_ready(vicreg_loss(x, y, mxu_dtype=jnp.float32))
    assert jnp.isfinite(loss_f32), "single-block f32 loss is not finite"
    assert jnp.allclose(loss_f32, ref, rtol=1e-3, atol=1e-3), (loss_f32, ref)

    # default (bf16 MXU feed) single-block path
    loss_bf16 = jax.block_until_ready(vicreg_loss(x, y))
    assert jnp.isfinite(loss_bf16), "single-block bf16 loss is not finite"
    assert jnp.allclose(loss_bf16, ref, rtol=3e-2, atol=3e-2), (loss_bf16, ref)

    # Blocked streaming path (production design): deep row tiles, 2 column blocks
    # -> 3 upper-triangular Gram-block pairs, per-pair scalar reduction.
    N2, D2 = 512, 256
    x2 = jax.random.normal(k3, (N2, D2), dtype=jnp.float32)
    y2 = x2 + 0.1 * jax.random.normal(k4, (N2, D2), dtype=jnp.float32)
    ref2 = jax.block_until_ready(_vicreg_ref(x2, y2))

    loss2_f32 = jax.block_until_ready(
        vicreg_loss(x2, y2, block_n=256, block_d=128, mxu_dtype=jnp.float32))
    assert jnp.isfinite(loss2_f32), "tiled f32 loss is not finite"
    assert jnp.allclose(loss2_f32, ref2, rtol=1e-3, atol=1e-3), (loss2_f32, ref2)

    loss2_bf16 = jax.block_until_ready(
        vicreg_loss(x2, y2, block_n=256, block_d=128))
    assert jnp.isfinite(loss2_bf16), "tiled bf16 loss is not finite"
    assert jnp.allclose(loss2_bf16, ref2, rtol=3e-2, atol=3e-2), (loss2_bf16, ref2)

    print("KERNEL_OK")
</pallas_src>

<mosaic_0001>
module attributes {stable_mosaic.version = 11 : i64} {
  func.func @kernel(%arg0: memref<8x32xf32, #tpu.memory_space<vmem>>, %arg1: memref<8x32xf32, #tpu.memory_space<vmem>>, %arg2: memref<1x1xf32, #tpu.memory_space<smem>>) attributes {dimension_semantics = [], scalar_prefetch = 0 : i64, scratch_operands = 0 : i64, tpu.core_type = #tpu.core_type<tc>} {
    %c0 = arith.constant 0 : index
    %c0_0 = arith.constant 0 : index
    %0 = vector.load %arg0[%c0, %c0_0] : memref<8x32xf32, #tpu.memory_space<vmem>>, vector<8x32xf32>
    %c0_1 = arith.constant 0 : index
    %c0_2 = arith.constant 0 : index
    %1 = vector.load %arg1[%c0_1, %c0_2] : memref<8x32xf32, #tpu.memory_space<vmem>>, vector<8x32xf32>
    %2 = arith.subf %0, %1 : vector<8x32xf32>
    %3 = arith.mulf %2, %2 : vector<8x32xf32>
    %4 = vector.shape_cast %3 : vector<8x32xf32> to vector<1x8x32xf32>
    %cst = arith.constant dense<0.000000e+00> : vector<1xf32>
    %5 = vector.multi_reduction <add>, %4, %cst [1, 2] : vector<1x8x32xf32> to vector<1xf32>
    %6 = vector.shape_cast %5 : vector<1xf32> to vector<1x1x1xf32>
    %7 = vector.extract %6[0, 0, 0] : f32 from vector<1x1x1xf32>
    %cst_3 = arith.constant 3.906250e-03 : f32
    %8 = arith.mulf %7, %cst_3 : f32
    %cst_4 = arith.constant dense<0.000000e+00> : vector<32xf32>
    %9 = vector.multi_reduction <add>, %0, %cst_4 [0] : vector<8x32xf32> to vector<32xf32>
    %10 = vector.shape_cast %9 : vector<32xf32> to vector<1x32xf32>
    %cst_5 = arith.constant 8.000000e+00 : f32
    %11 = vector.broadcast %cst_5 : f32 to vector<1x32xf32>
    %12 = arith.divf %10, %11 : vector<1x32xf32>
    %13 = vector.broadcast %12 : vector<1x32xf32> to vector<8x32xf32>
    %14 = arith.subf %0, %13 : vector<8x32xf32>
    %cst_6 = arith.constant dense<0.000000e+00> : vector<32xf32>
    %15 = vector.multi_reduction <add>, %1, %cst_6 [0] : vector<8x32xf32> to vector<32xf32>
    %16 = vector.shape_cast %15 : vector<32xf32> to vector<1x32xf32>
    %cst_7 = arith.constant 8.000000e+00 : f32
    %17 = vector.broadcast %cst_7 : f32 to vector<1x32xf32>
    %18 = arith.divf %16, %17 : vector<1x32xf32>
    %19 = vector.broadcast %18 : vector<1x32xf32> to vector<8x32xf32>
    %20 = arith.subf %1, %19 : vector<8x32xf32>
    %21 = arith.mulf %14, %14 : vector<8x32xf32>
    %cst_8 = arith.constant dense<0.000000e+00> : vector<32xf32>
    %22 = vector.multi_reduction <add>, %21, %cst_8 [0] : vector<8x32xf32> to vector<32xf32>
    %23 = vector.shape_cast %22 : vector<32xf32> to vector<1x32xf32>
    %24 = arith.mulf %20, %20 : vector<8x32xf32>
    %cst_9 = arith.constant dense<0.000000e+00> : vector<32xf32>
    %25 = vector.multi_reduction <add>, %24, %cst_9 [0] : vector<8x32xf32> to vector<32xf32>
    %26 = vector.shape_cast %25 : vector<32xf32> to vector<1x32xf32>
    %cst_10 = arith.constant 0.142857149 : f32
    %27 = vector.broadcast %cst_10 : f32 to vector<1x32xf32>
    %28 = arith.mulf %23, %27 : vector<1x32xf32>
    %cst_11 = arith.constant 9.99999974E-5 : f32
    %29 = vector.broadcast %cst_11 : f32 to vector<1x32xf32>
    %30 = arith.addf %28, %29 : vector<1x32xf32>
    %31 = math.sqrt %30 : vector<1x32xf32>
    %cst_12 = arith.constant 0.142857149 : f32
    %32 = vector.broadcast %cst_12 : f32 to vector<1x32xf32>
    %33 = arith.mulf %26, %32 : vector<1x32xf32>
    %cst_13 = arith.constant 9.99999974E-5 : f32
    %34 = vector.broadcast %cst_13 : f32 to vector<1x32xf32>
    %35 = arith.addf %33, %34 : vector<1x32xf32>
    %36 = math.sqrt %35 : vector<1x32xf32>
    %cst_14 = arith.constant 1.000000e+00 : f32
    %37 = vector.broadcast %cst_14 : f32 to vector<1x32xf32>
    %38 = arith.subf %37, %31 : vector<1x32xf32>
    %cst_15 = arith.constant 0.000000e+00 : f32
    %39 = vector.broadcast %cst_15 : f32 to vector<1x32xf32>
    %40 = arith.maximumf %38, %39 : vector<1x32xf32>
    %41 = vector.shape_cast %40 : vector<1x32xf32> to vector<1x1x32xf32>
    %cst_16 = arith.constant dense<0.000000e+00> : vector<1xf32>
    %42 = vector.multi_reduction <add>, %41, %cst_16 [1, 2] : vector<1x1x32xf32> to vector<1xf32>
    %43 = vector.shape_cast %42 : vector<1xf32> to vector<1x1x1xf32>
    %44 = vector.extract %43[0, 0, 0] : f32 from vector<1x1x1xf32>
    %cst_17 = arith.constant 3.200000e+01 : f32
    %45 = arith.divf %44, %cst_17 : f32
    %cst_18 = arith.constant 1.000000e+00 : f32
    %46 = vector.broadcast %cst_18 : f32 to vector<1x32xf32>
    %47 = arith.subf %46, %36 : vector<1x32xf32>
    %cst_19 = arith.constant 0.000000e+00 : f32
    %48 = vector.broadcast %cst_19 : f32 to vector<1x32xf32>
    %49 = arith.maximumf %47, %48 : vector<1x32xf32>
    %50 = vector.shape_cast %49 : vector<1x32xf32> to vector<1x1x32xf32>
    %cst_20 = arith.constant dense<0.000000e+00> : vector<1xf32>
    %51 = vector.multi_reduction <add>, %50, %cst_20 [1, 2] : vector<1x1x32xf32> to vector<1xf32>
    %52 = vector.shape_cast %51 : vector<1xf32> to vector<1x1x1xf32>
    %53 = vector.extract %52[0, 0, 0] : f32 from vector<1x1x1xf32>
    %cst_21 = arith.constant 3.200000e+01 : f32
    %54 = arith.divf %53, %cst_21 : f32
    %55 = arith.addf %45, %54 : f32
    %cst_22 = arith.constant dense<0.000000e+00> : vector<32x32xf32>
    %56 = tpu.matmul %14, %14, %cst_22 {dimension_numbers = #tpu.dot_dimension_numbers<[0], [0], [1], [1], [0, 1, 1, 1], [], []>} : vector<8x32xf32>, vector<8x32xf32>, vector<32x32xf32> -> vector<32x32xf32>
    %cst_23 = arith.constant dense<0.000000e+00> : vector<32x32xf32>
    %57 = tpu.matmul %20, %20, %cst_23 {dimension_numbers = #tpu.dot_dimension_numbers<[0], [0], [1], [1], [0, 1, 1, 1], [], []>} : vector<8x32xf32>, vector<8x32xf32>, vector<32x32xf32> -> vector<32x32xf32>
    %58 = arith.mulf %56, %56 : vector<32x32xf32>
    %59 = vector.shape_cast %58 : vector<32x32xf32> to vector<1x32x32xf32>
    %cst_24 = arith.constant dense<0.000000e+00> : vector<1xf32>
    %60 = vector.multi_reduction <add>, %59, %cst_24 [1, 2] : vector<1x32x32xf32> to vector<1xf32>
    %61 = vector.shape_cast %60 : vector<1xf32> to vector<1x1x1xf32>
    %62 = vector.extract %61[0, 0, 0] : f32 from vector<1x1x1xf32>
    %63 = arith.mulf %23, %23 : vector<1x32xf32>
    %64 = vector.shape_cast %63 : vector<1x32xf32> to vector<1x1x32xf32>
    %cst_25 = arith.constant dense<0.000000e+00> : vector<1xf32>
    %65 = vector.multi_reduction <add>, %64, %cst_25 [1, 2] : vector<1x1x32xf32> to vector<1xf32>
    %66 = vector.shape_cast %65 : vector<1xf32> to vector<1x1x1xf32>
    %67 = vector.extract %66[0, 0, 0] : f32 from vector<1x1x1xf32>
    %68 = arith.subf %62, %67 : f32
    %69 = arith.mulf %57, %57 : vector<32x32xf32>
    %70 = vector.shape_cast %69 : vector<32x32xf32> to vector<1x32x32xf32>
    %cst_26 = arith.constant dense<0.000000e+00> : vector<1xf32>
    %71 = vector.multi_reduction <add>, %70, %cst_26 [1, 2] : vector<1x32x32xf32> to vector<1xf32>
    %72 = vector.shape_cast %71 : vector<1xf32> to vector<1x1x1xf32>
    %73 = vector.extract %72[0, 0, 0] : f32 from vector<1x1x1xf32>
    %74 = arith.mulf %26, %26 : vector<1x32xf32>
    %75 = vector.shape_cast %74 : vector<1x32xf32> to vector<1x1x32xf32>
    %cst_27 = arith.constant dense<0.000000e+00> : vector<1xf32>
    %76 = vector.multi_reduction <add>, %75, %cst_27 [1, 2] : vector<1x1x32xf32> to vector<1xf32>
    %77 = vector.shape_cast %76 : vector<1xf32> to vector<1x1x1xf32>
    %78 = vector.extract %77[0, 0, 0] : f32 from vector<1x1x1xf32>
    %79 = arith.subf %73, %78 : f32
    %80 = arith.addf %68, %79 : f32
    %cst_28 = arith.constant 6.37755089E-4 : f32
    %81 = arith.mulf %80, %cst_28 : f32
    %cst_29 = arith.constant 2.500000e+01 : f32
    %82 = arith.mulf %cst_29, %8 : f32
    %cst_30 = arith.constant 2.500000e+01 : f32
    %83 = arith.mulf %cst_30, %55 : f32
    %84 = arith.addf %82, %83 : f32
    %cst_31 = arith.constant 1.000000e+00 : f32
    %85 = arith.mulf %cst_31, %81 : f32
    %86 = arith.addf %84, %85 : f32
    %c0_32 = arith.constant 0 : index
    %c0_33 = arith.constant 0 : index
    %87 = memref.load %arg2[%c0_32, %c0_33] : memref<1x1xf32, #tpu.memory_space<smem>>
    memref.store %86, %arg2[%c0_32, %c0_33] : memref<1x1xf32, #tpu.memory_space<smem>>
    return
  }
}

</mosaic_0001>

<llo_original>
// kernel: tpu_custom_call.1
$region0: #{tpu_custom_call.1}
  #allocation0 [shape = 'u32[]', space=smem, size = 0x4, offset = 0x4, fixed_abs, tag = 'smem constant byte address 0x4 - core index']
  #allocation1 [shape = 'u32[144,128]{1,0:T(1,128)}', space=vmem, size = 0x12000, scoped, tag = 'internal scratch']
  %s0 = inlined_call_operand.hbm [shape: f32[8,32], index: 0, kind: input, shape index: {}]
  %s1 = inlined_call_operand.hbm [shape: f32[8,32], index: 1, kind: input, shape index: {}]
  %s2 = inlined_call_operand.hbm [shape: f32[1,1], index: 2, kind: output, shape index: {}]
  %s3 = sld [smem:[#allocation0]]
  $region26: #{tpu_custom_call.1} parent=0
    _
  %s5 = ssub.s32 1, %s3
  %s6 = scalar_select 0, %s5, %s3
  $region1: #{tpu_custom_call.1} parent=0
    #allocation2 [shape = 'u8[4096]{0}', space=vmem, size = 0x1000, scoped, tag = 'input window, operand 0, single buffered']
    #allocation3 [shape = 's32[1]{0}', space=sflag, size = 0x4, scoped, tag = 'scoped memory for tpu_custom_call.1']
    #allocation4 [shape = 's32[1]{0}', space=sflag, size = 0x4, scoped, tag = 'scoped memory for tpu_custom_call.1']
    #allocation5 [shape = 'u8[4096]{0}', space=vmem, size = 0x1000, scoped, tag = 'input window, operand 1, single buffered']
    #allocation6 [shape = 's32[1]{0}', space=sflag, size = 0x4, scoped, tag = 'scoped memory for tpu_custom_call.1']
    #allocation7 [shape = 'u8[512]{0}', space=smem, size = 0x200, scoped, tag = 'output window, operand 0, single buffered']
    %7 = vsyncpa [#allocation3], 0
    %8 = vsyncpa [#allocation6], 0
    %9 = vsyncpa [#allocation4], 0
    // Predicated region
    $region2: #{tpu_custom_call.1} parent=1 // pred_check
      _
    $region3: #{tpu_custom_call.1} parent=1 // pred_check_branch
      %11 = sbr.rel (0) target = $region5
    $region4: #{tpu_custom_call.1} parent=1 // pred_region
      %s13 = ssub.s32 128, 128
      %14 = vsyncadd [#allocation3], %s13
      %s16 = sshll.u32 [#allocation2], 4
      %s17 = int_to_ptr.vmem [resolvable:$true] %s16
      %19 = dma.hbm_to_vmem [thread:$0]  %s0, 128, %s17, [#allocation3]
    $region5: #{tpu_custom_call.1} parent=1 // pred_fallthru
      _
    // Predicated region
    $region6: #{tpu_custom_call.1} parent=1 // pred_check
      _
    $region7: #{tpu_custom_call.1} parent=1 // pred_check_branch
      %21 = sbr.rel (0) target = $region9
    $region8: #{tpu_custom_call.1} parent=1 // pred_region
      %s23 = ssub.s32 128, 128
      %24 = vsyncadd [#allocation6], %s23
      %s26 = sshll.u32 [#allocation5], 4
      %s27 = int_to_ptr.vmem [resolvable:$true] %s26
      %29 = dma.hbm_to_vmem [thread:$0]  %s1, 128, %s27, [#allocation6]
    $region9: #{tpu_custom_call.1} parent=1 // pred_fallthru
      _
    // Predicated region
    $region10: #{tpu_custom_call.1} parent=1 // pred_check
      _
    $region11: #{tpu_custom_call.1} parent=1 // pred_check_branch
      %31 = sbr.rel (0) target = $region13
    $region12: #{tpu_custom_call.1} parent=1 // pred_region
      %32 = dma.done [#allocation3], 128
    $region13: #{tpu_custom_call.1} parent=1 // pred_fallthru
      _
    // Predicated region
    $region14: #{tpu_custom_call.1} parent=1 // pred_check
      _
    $region15: #{tpu_custom_call.1} parent=1 // pred_check_branch
      %34 = sbr.rel (0) target = $region17
    $region16: #{tpu_custom_call.1} parent=1 // pred_region
      %35 = dma.done [#allocation6], 128
    $region17: #{tpu_custom_call.1} parent=1 // pred_fallthru
      _
    %v36 = vld [vmem:[#allocation2] sm:$0xff]
    %v37 = vld [vmem:[#allocation5] sm:$0xff]
    %v38 = vsub.f32 %v36, %v37
    %v39 = vmul.f32 %v38, %v38
    %vm40 = vcmask 261120
    %v41 = vsel %vm40, %v39, 0.0
    %42 = vadd.xlane.f32.xlu0 %v41
    %v43 = vpop.xlane.xlu0 %42
    %v44 = vrot.slane %v43, 4
    %v45 = vadd.f32 %v43, %v44
    %v46 = vrot.slane %v45, 2
    %v47 = vadd.f32 %v45, %v46
    %v48 = vrot.slane %v47, 1
    %v49 = vadd.f32 %v47, %v48
    %s50 = vtos %v49
    %s51 = smul.f32 %s50, 0.00390625
    %v52 = vsel %vm40, %v36, 0.0
    %v53 = vrot.slane %v52, 4
    %v54 = vadd.f32 %v52, %v53
    %v55 = vrot.slane %v54, 2
    %v56 = vadd.f32 %v54, %v55
    %v57 = vrot.slane %v56, 1
    %v58 = vadd.f32 %v56, %v57
    %v59 = vrcp.pop 8.0
    %v60 = vmul.f32 %v58, %v59
    %v61 = vsub.f32 %v36, %v60
    %v62 = vsel %vm40, %v37, 0.0
    %v63 = vrot.slane %v62, 4
    %v64 = vadd.f32 %v62, %v63
    %v65 = vrot.slane %v64, 2
    %v66 = vadd.f32 %v64, %v65
    %v67 = vrot.slane %v66, 1
    %v68 = vadd.f32 %v66, %v67
    %v69 = vmul.f32 %v68, %v59
    %v70 = vsub.f32 %v37, %v69
    %v71 = vmul.f32 %v61, %v61
    %v72 = vsel %vm40, %v71, 0.0
    %v73 = vrot.slane %v72, 4
    %v74 = vadd.f32 %v72, %v73
    %v75 = vrot.slane %v74, 2
    %v76 = vadd.f32 %v74, %v75
    %v77 = vrot.slane %v76, 1
    %v78 = vadd.f32 %v76, %v77
    %v79 = vmul.f32 %v70, %v70
    %v80 = vsel %vm40, %v79, 0.0
    %v81 = vrot.slane %v80, 4
    %v82 = vadd.f32 %v80, %v81
    %v83 = vrot.slane %v82, 2
    %v84 = vadd.f32 %v82, %v83
    %v85 = vrot.slane %v84, 1
    %v86 = vadd.f32 %v84, %v85
    %v87 = vmul.f32 %v78, 0.14285715
    %v88 = vadd.f32 %v87, 0.0001
    %v89 = vrsqrt.pop %v88
    %v90 = vmul.f32 %v88, %v89
    %vm91 = vcmp.eq.f32.partialorder %v88, inf
    %v92 = vsel %vm91, %v88, %v90
    %vm93 = vcmp.eq.f32.partialorder %v88, 0.0
    %v94 = vand.u32 %v88, 2147483648
    %v95 = vsel %vm93, %v94, %v92
    %v96 = vmul.f32 %v86, 0.14285715
    %v97 = vadd.f32 %v96, 0.0001
    %v98 = vrsqrt.pop %v97
    %v99 = vmul.f32 %v97, %v98
    %vm100 = vcmp.eq.f32.partialorder %v97, inf
    %v101 = vsel %vm100, %v97, %v99
    %vm102 = vcmp.eq.f32.partialorder %v97, 0.0
    %v103 = vand.u32 %v97, 2147483648
    %v104 = vsel %vm102, %v103, %v101
    %v105 = vsub.f32 1.0, %v95
    %v106 = vmax.f32 %v105, 0.0
    %vm107 = vcmask 253952
    %v108 = vsel %vm107, %v106, 0.0
    %109 = vadd.xlane.f32.xlu0 %v108
    %v110 = vpop.xlane.xlu0 %109
    %v111 = vrot.slane %v110, 4
    %v112 = vadd.f32 %v110, %v111
    %v113 = vrot.slane %v112, 2
    %v114 = vadd.f32 %v112, %v113
    %v115 = vrot.slane %v114, 1
    %v116 = vadd.f32 %v114, %v115
    %s117 = vtos %v116
    %v118 = vrcp.pop 32.0
    %s119 = vtos %v118
    %s120 = smul.f32 %s117, %s119
    %v121 = vsub.f32 1.0, %v104
    %v122 = vmax.f32 %v121, 0.0
    %v123 = vsel %vm107, %v122, 0.0
    %124 = vadd.xlane.f32.xlu0 %v123
    %v125 = vpop.xlane.xlu0 %124
    %v126 = vrot.slane %v125, 4
    %v127 = vadd.f32 %v125, %v126
    %v128 = vrot.slane %v127, 2
    %v129 = vadd.f32 %v127, %v128
    %v130 = vrot.slane %v129, 1
    %v131 = vadd.f32 %v129, %v130
    %s132 = vtos %v131
    %v133 = vrcp.pop 32.0
    %s134 = vtos %v133
    %s135 = smul.f32 %s132, %s134
    %s136 = sadd.f32 %s120, %s135
    %137 = vxpose.xlu0.b32.start [1/16] %v61, 128
    %138 = vxpose.xlu0.b32.cont [2/16] 0.0, 128
    %139 = vxpose.xlu0.b32.cont [3/16] 0.0, 128
    %140 = vxpose.xlu0.b32.cont [4/16] 0.0, 128
    %141 = vxpose.xlu0.b32.cont [5/16] 0.0, 128
    %142 = vxpose.xlu0.b32.cont [6/16] 0.0, 128
    %143 = vxpose.xlu0.b32.cont [7/16] 0.0, 128
    %144 = vxpose.xlu0.b32.cont [8/16] 0.0, 128
    %145 = vxpose.xlu0.b32.cont [9/16] 0.0, 128
    %146 = vxpose.xlu0.b32.cont [10/16] 0.0, 128
    %147 = vxpose.xlu0.b32.cont [11/16] 0.0, 128
    %148 = vxpose.xlu0.b32.cont [12/16] 0.0, 128
    %149 = vxpose.xlu0.b32.cont [13/16] 0.0, 128
    %150 = vxpose.xlu0.b32.cont [14/16] 0.0, 128
    %151 = vxpose.xlu0.b32.cont [15/16] 0.0, 128
    %152 = vxpose.xlu0.b32.end [16/16] 0.0, 128
    %v153 = vpop.trf.xlu0
    %v154 = vpop.trf.xlu0
    %v155 = vpop.trf.xlu0
    %v156 = vpop.trf.xlu0
    %v157 = vpop.trf.xlu0
    %v158 = vpop.trf.xlu0
    %v159 = vpop.trf.xlu0
    %v160 = vpop.trf.xlu0
    %v161 = vpop.trf.xlu0
    %v162 = vpop.trf.xlu0
    %v163 = vpop.trf.xlu0
    %v164 = vpop.trf.xlu0
    %v165 = vpop.trf.xlu0
    %v166 = vpop.trf.xlu0
    %v167 = vpop.trf.xlu0
    %v168 = vpop.trf.xlu0
    %vm169 = vcmask 64512
    %v171 = vsel %vm169, %v153, 0
    %v174 = vsel %vm169, %v154, 0
    %v177 = vsel %vm169, %v155, 0
    %v180 = vsel %vm169, %v156, 0
    %182 = vmatprep.subr.mxu0 0.0
    %183 = vmatpush1.msra.mxu0 %v61
    %184 = vmatprep.subr.mxu0 0.0
    %185 = vmatpush1.msra.mxu0 0.0
    %186 = vmatprep.subr.mxu0 0.0
    %187 = vmatpush1.msra.mxu0 0.0
    %188 = vmatprep.subr.mxu0 0.0
    %189 = vmatpush1.msra.mxu0 0.0
    %190 = vmatprep.subr.mxu0 0.0
    %191 = vmatpush1.msra.mxu0 0.0
    %192 = vmatprep.subr.mxu0 0.0
    %193 = vmatpush1.msra.mxu0 0.0
    %194 = vmatprep.subr.mxu0 0.0
    %195 = vmatpush1.msra.mxu0 0.0
    %196 = vmatprep.subr.mxu0 0.0
    %197 = vmatpush1.msra.mxu0 0.0
    %198 = vmatprep.subr.mxu0 0.0
    %199 = vmatpush1.msra.mxu0 0.0
    %200 = vmatprep.subr.mxu0 0.0
    %201 = vmatpush1.msra.mxu0 0.0
    %202 = vmatprep.subr.mxu0 0.0
    %203 = vmatpush1.msra.mxu0 0.0
    %204 = vmatprep.subr.mxu0 0.0
    %205 = vmatpush1.msra.mxu0 0.0
    %206 = vmatprep.subr.mxu0 0.0
    %207 = vmatpush1.msra.mxu0 0.0
    %208 = vmatprep.subr.mxu0 0.0
    %209 = vmatpush1.msra.mxu0 0.0
    %210 = vmatprep.subr.mxu0 0.0
    %211 = vmatpush1.msra.mxu0 0.0
    %212 = vmatprep.subr.mxu0 0.0
    %213 = vmatpush1.msra.mxu0 0.0
    %214 = vmatprep.subr.mxu0 0.0
    %215 = vmatpush1.msra.mxu0 0.0
    %216 = vmatprep.subr.mxu0 0.0
    %217 = vmatpush1.msra.mxu0 0.0
    %218 = vmatprep.subr.mxu0 0.0
    %219 = vmatpush1.msra.mxu0 0.0
    %220 = vmatprep.subr.mxu0 0.0
    %221 = vmatpush1.msra.mxu0 0.0
    %222 = vmatprep.subr.mxu0 0.0
    %223 = vmatpush1.msra.mxu0 0.0
    %224 = vmatprep.subr.mxu0 0.0
    %225 = vmatpush1.msra.mxu0 0.0
    %226 = vmatprep.subr.mxu0 0.0
    %227 = vmatpush1.msra.mxu0 0.0
    %228 = vmatprep.subr.mxu0 0.0
    %229 = vmatpush1.msra.mxu0 0.0
    %230 = vmatprep.subr.mxu0 0.0
    %231 = vmatpush1.msra.mxu0 0.0
    %232 = vmatprep.subr.mxu0 0.0
    %233 = vmatpush1.msra.mxu0 0.0
    %234 = vmatprep.subr.mxu0 0.0
    %235 = vmatpush1.msra.mxu0 0.0
    %236 = vmatprep.subr.mxu0 0.0
    %237 = vmatpush1.msra.mxu0 0.0
    %238 = vmatprep.subr.mxu0 0.0
    %239 = vmatpush1.msra.mxu0 0.0
    %240 = vmatprep.subr.mxu0 0.0
    %241 = vmatpush1.msra.mxu0 0.0
    %242 = vmatprep.subr.mxu0 0.0
    %243 = vmatpush1.msra.mxu0 0.0
    %244 = vmatprep.subr.mxu0 0.0
    %245 = vmatpush1.msra.mxu0 0.0
    %246 = vmatprep.mubr.f32.mxu0 0.0
    %247 = vmatmul.mubr.f32.gmra.mrb[0].mxu0 %v171
    %v248 = vpop.f32.mrb[0].mxu0
    %v249 = vadd.f32 0.0, %v248
    %v250 = vpop.f32.mrb[0].mxu0
    %251 = vmatprep.mubr.f32.mxu0 0.0
    %252 = vmatmul.mubr.f32.gmra.mrb[0].mxu0 %v174
    %v253 = vpop.f32.mrb[0].mxu0
    %v254 = vadd.f32 0.0, %v253
    %v255 = vpop.f32.mrb[0].mxu0
    %256 = vmatprep.mubr.f32.mxu0 0.0
    %257 = vmatmul.mubr.f32.gmra.mrb[0].mxu0 %v177
    %v258 = vpop.f32.mrb[0].mxu0
    %v259 = vadd.f32 0.0, %v258
    %v260 = vpop.f32.mrb[0].mxu0
    %261 = vmatprep.mubr.f32.mxu0 0.0
    %262 = vmatmul.mubr.f32.gmra.mrb[0].mxu0 %v180
    %v263 = vpop.f32.mrb[0].mxu0
    %v264 = vadd.f32 0.0, %v263
    %v265 = vpop.f32.mrb[0].mxu0
    %266 = vdwg.mxu0
    %267 = vxpose.xlu0.b32.start [1/16] %v70, 128
    %268 = vxpose.xlu0.b32.cont [2/16] 0.0, 128
    %269 = vxpose.xlu0.b32.cont [3/16] 0.0, 128
    %270 = vxpose.xlu0.b32.cont [4/16] 0.0, 128
    %271 = vxpose.xlu0.b32.cont [5/16] 0.0, 128
    %272 = vxpose.xlu0.b32.cont [6/16] 0.0, 128
    %273 = vxpose.xlu0.b32.cont [7/16] 0.0, 128
    %274 = vxpose.xlu0.b32.cont [8/16] 0.0, 128
    %275 = vxpose.xlu0.b32.cont [9/16] 0.0, 128
    %276 = vxpose.xlu0.b32.cont [10/16] 0.0, 128
    %277 = vxpose.xlu0.b32.cont [11/16] 0.0, 128
    %278 = vxpose.xlu0.b32.cont [12/16] 0.0, 128
    %279 = vxpose.xlu0.b32.cont [13/16] 0.0, 128
    %280 = vxpose.xlu0.b32.cont [14/16] 0.0, 128
    %281 = vxpose.xlu0.b32.cont [15/16] 0.0, 128
    %282 = vxpose.xlu0.b32.end [16/16] 0.0, 128
    %v283 = vpop.trf.xlu0
    %v284 = vpop.trf.xlu0
    %v285 = vpop.trf.xlu0
    %v286 = vpop.trf.xlu0
    %v287 = vpop.trf.xlu0
    %v288 = vpop.trf.xlu0
    %v289 = vpop.trf.xlu0
    %v290 = vpop.trf.xlu0
    %v291 = vpop.trf.xlu0
    %v292 = vpop.trf.xlu0
    %v293 = vpop.trf.xlu0
    %v294 = vpop.trf.xlu0
    %v295 = vpop.trf.xlu0
    %v296 = vpop.trf.xlu0
    %v297 = vpop.trf.xlu0
    %v298 = vpop.trf.xlu0
    %v300 = vsel %vm169, %v283, 0
    %v303 = vsel %vm169, %v284, 0
    %v306 = vsel %vm169, %v285, 0
    %v309 = vsel %vm169, %v286, 0
    %311 = vmatprep.subr.mxu0 0.0
    %312 = vmatpush1.msra.mxu0 %v70
    %313 = vmatprep.subr.mxu0 0.0
    %314 = vmatpush1.msra.mxu0 0.0
    %315 = vmatprep.subr.mxu0 0.0
    %316 = vmatpush1.msra.mxu0 0.0
    %317 = vmatprep.subr.mxu0 0.0
    %318 = vmatpush1.msra.mxu0 0.0
    %319 = vmatprep.subr.mxu0 0.0
    %320 = vmatpush1.msra.mxu0 0.0
    %321 = vmatprep.subr.mxu0 0.0
    %322 = vmatpush1.msra.mxu0 0.0
    %323 = vmatprep.subr.mxu0 0.0
    %324 = vmatpush1.msra.mxu0 0.0
    %325 = vmatprep.subr.mxu0 0.0
    %326 = vmatpush1.msra.mxu0 0.0
    %327 = vmatprep.subr.mxu0 0.0
    %328 = vmatpush1.msra.mxu0 0.0
    %329 = vmatprep.subr.mxu0 0.0
    %330 = vmatpush1.msra.mxu0 0.0
    %331 = vmatprep.subr.mxu0 0.0
    %332 = vmatpush1.msra.mxu0 0.0
    %333 = vmatprep.subr.mxu0 0.0
    %334 = vmatpush1.msra.mxu0 0.0
    %335 = vmatprep.subr.mxu0 0.0
    %336 = vmatpush1.msra.mxu0 0.0
    %337 = vmatprep.subr.mxu0 0.0
    %338 = vmatpush1.msra.mxu0 0.0
    %339 = vmatprep.subr.mxu0 0.0
    %340 = vmatpush1.msra.mxu0 0.0
    %341 = vmatprep.subr.mxu0 0.0
    %342 = vmatpush1.msra.mxu0 0.0
    %343 = vmatprep.subr.mxu0 0.0
    %344 = vmatpush1.msra.mxu0 0.0
    %345 = vmatprep.subr.mxu0 0.0
    %346 = vmatpush1.msra.mxu0 0.0
    %347 = vmatprep.subr.mxu0 0.0
    %348 = vmatpush1.msra.mxu0 0.0
    %349 = vmatprep.subr.mxu0 0.0
    %350 = vmatpush1.msra.mxu0 0.0
    %351 = vmatprep.subr.mxu0 0.0
    %352 = vmatpush1.msra.mxu0 0.0
    %353 = vmatprep.subr.mxu0 0.0
    %354 = vmatpush1.msra.mxu0 0.0
    %355 = vmatprep.subr.mxu0 0.0
    %356 = vmatpush1.msra.mxu0 0.0
    %357 = vmatprep.subr.mxu0 0.0
    %358 = vmatpush1.msra.mxu0 0.0
    %359 = vmatprep.subr.mxu0 0.0
    %360 = vmatpush1.msra.mxu0 0.0
    %361 = vmatprep.subr.mxu0 0.0
    %362 = vmatpush1.msra.mxu0 0.0
    %363 = vmatprep.subr.mxu0 0.0
    %364 = vmatpush1.msra.mxu0 0.0
    %365 = vmatprep.subr.mxu0 0.0
    %366 = vmatpush1.msra.mxu0 0.0
    %367 = vmatprep.subr.mxu0 0.0
    %368 = vmatpush1.msra.mxu0 0.0
    %369 = vmatprep.subr.mxu0 0.0
    %370 = vmatpush1.msra.mxu0 0.0
    %371 = vmatprep.subr.mxu0 0.0
    %372 = vmatpush1.msra.mxu0 0.0
    %373 = vmatprep.subr.mxu0 0.0
    %374 = vmatpush1.msra.mxu0 0.0
    %375 = vmatprep.mubr.f32.mxu0 0.0
    %376 = vmatmul.mubr.f32.gmra.mrb[0].mxu0 %v300
    %v377 = vpop.f32.mrb[0].mxu0
    %v378 = vadd.f32 0.0, %v377
    %v379 = vpop.f32.mrb[0].mxu0
    %380 = vmatprep.mubr.f32.mxu0 0.0
    %381 = vmatmul.mubr.f32.gmra.mrb[0].mxu0 %v303
    %v382 = vpop.f32.mrb[0].mxu0
    %v383 = vadd.f32 0.0, %v382
    %v384 = vpop.f32.mrb[0].mxu0
    %385 = vmatprep.mubr.f32.mxu0 0.0
    %386 = vmatmul.mubr.f32.gmra.mrb[0].mxu0 %v306
    %v387 = vpop.f32.mrb[0].mxu0
    %v388 = vadd.f32 0.0, %v387
    %v389 = vpop.f32.mrb[0].mxu0
    %390 = vmatprep.mubr.f32.mxu0 0.0
    %391 = vmatmul.mubr.f32.gmra.mrb[0].mxu0 %v309
    %v392 = vpop.f32.mrb[0].mxu0
    %v393 = vadd.f32 0.0, %v392
    %v394 = vpop.f32.mrb[0].mxu0
    %395 = vdwg.mxu0
    %v396 = vmul.f32 %v249, %v249
    %v397 = vmul.f32 %v254, %v254
    %v398 = vmul.f32 %v259, %v259
    %v399 = vmul.f32 %v264, %v264
    %v400 = vsel %vm40, %v396, 0.0
    %v401 = vsel %vm40, %v397, 0.0
    %v402 = vadd.f32 %v400, %v401
    %v403 = vsel %vm40, %v398, 0.0
    %v404 = vadd.f32 %v402, %v403
    %v405 = vsel %vm40, %v399, 0.0
    %v406 = vadd.f32 %v404, %v405
    %407 = vadd.xlane.f32.xlu0 %v406
    %v408 = vpop.xlane.xlu0 %407
    %v409 = vrot.slane %v408, 4
    %v410 = vadd.f32 %v408, %v409
    %v411 = vrot.slane %v410, 2
    %v412 = vadd.f32 %v410, %v411
    %v413 = vrot.slane %v412, 1
    %v414 = vadd.f32 %v412, %v413
    %s415 = vtos %v414
    %v416 = vmul.f32 %v78, %v78
    %v417 = vsel %vm107, %v416, 0.0
    %418 = vadd.xlane.f32.xlu0 %v417
    %v419 = vpop.xlane.xlu0 %418
    %v420 = vrot.slane %v419, 4
    %v421 = vadd.f32 %v419, %v420
    %v422 = vrot.slane %v421, 2
    %v423 = vadd.f32 %v421, %v422
    %v424 = vrot.slane %v423, 1
    %v425 = vadd.f32 %v423, %v424
    %s426 = vtos %v425
    %s427 = ssub.f32 %s415, %s426
    %v428 = vmul.f32 %v378, %v378
    %v429 = vmul.f32 %v383, %v383
    %v430 = vmul.f32 %v388, %v388
    %v431 = vmul.f32 %v393, %v393
    %v432 = vsel %vm40, %v428, 0.0
    %v433 = vsel %vm40, %v429, 0.0
    %v434 = vadd.f32 %v432, %v433
    %v435 = vsel %vm40, %v430, 0.0
    %v436 = vadd.f32 %v434, %v435
    %v437 = vsel %vm40, %v431, 0.0
    %v438 = vadd.f32 %v436, %v437
    %439 = vadd.xlane.f32.xlu0 %v438
    %v440 = vpop.xlane.xlu0 %439
    %v441 = vrot.slane %v440, 4
    %v442 = vadd.f32 %v440, %v441
    %v443 = vrot.slane %v442, 2
    %v444 = vadd.f32 %v442, %v443
    %v445 = vrot.slane %v444, 1
    %v446 = vadd.f32 %v444, %v445
    %s447 = vtos %v446
    %v448 = vmul.f32 %v86, %v86
    %v449 = vsel %vm107, %v448, 0.0
    %450 = vadd.xlane.f32.xlu0 %v449
    %v451 = vpop.xlane.xlu0 %450
    %v452 = vrot.slane %v451, 4
    %v453 = vadd.f32 %v451, %v452
    %v454 = vrot.slane %v453, 2
    %v455 = vadd.f32 %v453, %v454
    %v456 = vrot.slane %v455, 1
    %v457 = vadd.f32 %v455, %v456
    %s458 = vtos %v457
    %s459 = ssub.f32 %s447, %s458
    %s460 = sadd.f32 %s427, %s459
    %s461 = smul.f32 %s460, 0.0006377551
    %s462 = smul.f32 %s51, 25.0
    %s463 = smul.f32 %s136, 25.0
    %s464 = sadd.f32 %s462, %s463
    %s465 = sadd.f32 %s464, %s461
    %s466 = scalar_lea.smem [#allocation7], 0
    %467 = sst [smem:[%s466]] %s465
    // Predicated region
    $region18: #{tpu_custom_call.1} parent=1 // pred_check
      _
    $region19: #{tpu_custom_call.1} parent=1 // pred_check_branch
      %469 = sbr.rel (0) target = $region21
    $region20: #{tpu_custom_call.1} parent=1 // pred_region
      %s471 = ssub.s32 16, 16
      %472 = vsyncadd [#allocation4], %s471
      %475 = dma.smem_to_hbm [#allocation7], 16, %s2, [#allocation4]
    $region21: #{tpu_custom_call.1} parent=1 // pred_fallthru
      _
    // Predicated region
    $region22: #{tpu_custom_call.1} parent=1 // pred_check
      _
    $region23: #{tpu_custom_call.1} parent=1 // pred_check_branch
      %477 = sbr.rel (0) target = $region25
    $region24: #{tpu_custom_call.1} parent=1 // pred_region
      %478 = dma.done [#allocation4], 16
    $region25: #{tpu_custom_call.1} parent=1 // pred_fallthru
      _
    %479 = sfence
    %480 = vsyncpa [#allocation3], 1
    %481 = vsyncpa [#allocation6], 1
    %482 = vsyncpa [#allocation4], 1

</llo_original>
